<compile_context>
chip_gen: v7x
topology: tpu7x:2x2x1
jax: 0.10.0
libtpu: 0.0.40
codegen_flags: <defaults>
</compile_context>

<pallas_src>
import functools

import jax
import jax.numpy as jnp
from jax.experimental import pallas as pl
from jax.experimental.pallas import tpu as pltpu


def _gated_residual_kernel(
    x_ref,      # (1, T, C)        full sequence, resident in VMEM per batch
    ctx_ref,    # (1, tile_t, C)   context tile
    w0_ref,     # (C, 2C)  tap-0 weights  [wf[:,:,0].T | wg[:,:,0].T]
    w1_ref,     # (C, 2C)  tap-1 weights  [wf[:,:,1].T | wg[:,:,1].T]
    wc_ref,     # (C, 2C)  context 1x1    [wcf.T | wcg.T]
    bc_ref,     # (1, 2C)  f32 bias       [bcf | bcg]
    wr_ref,     # (C, C)   residual 1x1 weight (pre-transposed)
    br_ref,     # (1, C)   f32 bias
    ws_ref,     # (C, S)   skip 1x1 weight (pre-transposed)
    bs_ref,     # (1, S)   f32 bias
    res_ref,    # (1, tile_t, C)
    skip_ref,   # (1, skip_size, S) if skip_tail_start is not None else (1, tile_t, S)
    *, tile_t, dilation, single_tile, skip_tail_start,
):
    C = w0_ref.shape[0]

    if single_tile:
        # Whole T_out in one tile: static slices only (cheapest / safest path).
        x0 = x_ref[0, 0:tile_t, :]
        x1 = x_ref[0, dilation:dilation + tile_t, :]
    else:
        start = pl.multiple_of(pl.program_id(1) * tile_t, tile_t)
        x0 = x_ref[0, pl.ds(start, tile_t), :]
        x1 = x_ref[0, pl.ds(start + dilation, tile_t), :]
    ctx = ctx_ref[0]                                      # (tile_t, C)

    # Fused filter+gate pre-activations: three (tile_t, C) @ (C, 2C) MXU dots,
    # all accumulated in f32 (no in-kernel transposes; weights pre-transposed).
    fg = jnp.dot(x0, w0_ref[...], preferred_element_type=jnp.float32)
    fg = fg + jnp.dot(x1, w1_ref[...], preferred_element_type=jnp.float32)
    fg = fg + jnp.dot(ctx, wc_ref[...], preferred_element_type=jnp.float32)
    fg = fg + bc_ref[...]

    gated = jnp.tanh(fg[:, :C]) * jax.nn.sigmoid(fg[:, C:])   # f32, (tile_t, C)
    gated_c = gated.astype(wr_ref.dtype)

    # Residual 1x1 conv + bias + causal residual add (x tail), stored directly.
    res = (jnp.dot(gated_c, wr_ref[...], preferred_element_type=jnp.float32)
           + br_ref[...] + x1.astype(jnp.float32))
    res_ref[0] = res.astype(res_ref.dtype)

    # Skip 1x1 conv: in the single-tile path only the last skip_size rows are
    # ever consumed downstream, so compute/store just that tail.
    if skip_tail_start is None:
        skip_in = gated_c
    else:
        skip_in = gated_c[skip_tail_start:, :]
    skip = (jnp.dot(skip_in, ws_ref[...], preferred_element_type=jnp.float32)
            + bs_ref[...])
    skip_ref[0] = skip.astype(skip_ref.dtype)


def _pick_tile_t(T_out, C, bytes_per_elem):
    """Time-tile size that divides T_out exactly (no ragged tiles).

    Targets >= ~1 MiB of activation payload per grid step (per-step overhead is
    ~0.35 us) and returns T_out itself for short sequences.
    """
    row_bytes = max(C * bytes_per_elem, 1)
    target = max(1024, (1 << 20) // row_bytes)
    if T_out <= target:
        return T_out
    best = T_out
    cand = 8
    while cand <= target:
        if T_out % cand == 0:
            best = cand
        cand += 8
    # TODO(synk): for awkward (prime-ish) long T_out, pad the time axis in the
    # wrapper instead of falling back to one whole-sequence tile.
    return best


def gated_residual_conv1d_btc(x_btc, ctx_btc, params, *, dilation, skip_size,
                              compute_dtype=jnp.bfloat16,
                              residual_dtype=jnp.float32, skip_dtype=None):
    """Channels-last core. x_btc: (B, T, C), ctx_btc: (B, T - dilation, C).

    Returns residual (B, T_out, C) and skip (B, skip_size, S), channels last.
    """
    B, T, C = x_btc.shape
    T_out = T - dilation
    S = params["ws"].shape[0]
    if skip_dtype is None:
        skip_dtype = compute_dtype
    assert ctx_btc.shape == (B, T_out, C), (ctx_btc.shape, (B, T_out, C))
    assert 0 < skip_size <= T_out

    x = x_btc.astype(compute_dtype)
    ctx = ctx_btc.astype(compute_dtype)

    # ---- fuse + pre-transpose weights to (C_in, C_out); done once, outside ----
    wf, wg = params["wf"], params["wg"]                                # (C, C, 2)
    w0 = jnp.concatenate([wf[:, :, 0].T, wg[:, :, 0].T], axis=1)       # (C, 2C)
    w1 = jnp.concatenate([wf[:, :, 1].T, wg[:, :, 1].T], axis=1)       # (C, 2C)
    wc = jnp.concatenate([params["wcf"][:, :, 0].T,
                          params["wcg"][:, :, 0].T], axis=1)           # (C, 2C)
    bc = jnp.concatenate([params["bcf"], params["bcg"]]).reshape(1, 2 * C)
    wr = params["wr"][:, :, 0].T                                       # (C, C)
    br = params["br"].reshape(1, C)
    ws = params["ws"][:, :, 0].T                                       # (C, S)
    bs = params["bs"].reshape(1, S)
    w0 = w0.astype(compute_dtype)
    w1 = w1.astype(compute_dtype)
    wc = wc.astype(compute_dtype)
    wr = wr.astype(compute_dtype)
    ws = ws.astype(compute_dtype)
    bc = bc.astype(jnp.float32)
    br = br.astype(jnp.float32)
    bs = bs.astype(jnp.float32)

    # ---- tiling: time tiles always divide T_out exactly ----------------------
    bpe = jnp.dtype(compute_dtype).itemsize
    tile_t = _pick_tile_t(T_out, C, bpe)
    n_tt = T_out // tile_t
    single_tile = n_tt == 1
    skip_t_len = skip_size if single_tile else T_out

    kernel = functools.partial(
        _gated_residual_kernel,
        tile_t=tile_t, dilation=dilation, single_tile=single_tile,
        skip_tail_start=(T_out - skip_size) if single_tile else None)

    def _const(arr):
        nd = arr.ndim
        return pl.BlockSpec(arr.shape, lambda b, t, _n=nd: (0,) * _n)

    if single_tile:
        skip_spec = pl.BlockSpec((1, skip_size, S), lambda b, t: (b, 0, 0))
    else:
        skip_spec = pl.BlockSpec((1, tile_t, S), lambda b, t: (b, t, 0))

    res, skip = pl.pallas_call(
        kernel,
        out_shape=(jax.ShapeDtypeStruct((B, T_out, C), residual_dtype),
                   jax.ShapeDtypeStruct((B, skip_t_len, S), skip_dtype)),
        grid_spec=pltpu.PrefetchScalarGridSpec(
            num_scalar_prefetch=0,
            grid=(B, n_tt),
            in_specs=[
                # x: fetched once per batch, resident across time tiles.
                pl.BlockSpec((1, T, C), lambda b, t: (b, 0, 0)),
                pl.BlockSpec((1, tile_t, C), lambda b, t: (b, t, 0)),
                _const(w0), _const(w1), _const(wc), _const(bc),
                _const(wr), _const(br), _const(ws), _const(bs),
            ],
            out_specs=[
                pl.BlockSpec((1, tile_t, C), lambda b, t: (b, t, 0)),
                skip_spec,
            ],
        ),
        compiler_params=pltpu.CompilerParams(
            dimension_semantics=("parallel", "parallel"),
            vmem_limit_bytes=48 * 1024 * 1024,   # <= v7x 64 MiB physical VMEM
        ),
    )(x, ctx, w0, w1, wc, bc, wr, br, ws, bs)

    if not single_tile:
        skip = skip[:, T_out - skip_size:, :]
    return res, skip


def gated_residual_conv1d(x_ncw, ctx_ncw, params, *, dilation, skip_size,
                          compute_dtype=jnp.bfloat16,
                          residual_dtype=jnp.float32, skip_dtype=None):
    """PyTorch-layout (NCW) wrapper. x: (B, C, T), ctx: (B, C, T - dilation).

    Returns (residual (B, C, T_out), skip (B, S, skip_size)).
    """
    # TODO(synk): if the surrounding model keeps activations channels-last,
    # call gated_residual_conv1d_btc directly and drop these transposes
    # (each is a full extra HBM pass over the activations).
    res, skip = gated_residual_conv1d_btc(
        jnp.transpose(x_ncw, (0, 2, 1)),
        jnp.transpose(ctx_ncw, (0, 2, 1)),
        params, dilation=dilation, skip_size=skip_size,
        compute_dtype=compute_dtype, residual_dtype=residual_dtype,
        skip_dtype=skip_dtype)
    return jnp.transpose(res, (0, 2, 1)), jnp.transpose(skip, (0, 2, 1))


def _reference(x, ctx, p, dilation, skip_size):
    """Pure-JAX f32 reference (mirrors the PyTorch forward)."""
    d = dilation
    T = x.shape[-1]
    T_out = T - d
    x0, x1 = x[:, :, :T_out], x[:, :, d:]
    conv2 = lambda w: (jnp.einsum("oi,bit->bot", w[:, :, 0], x0)
                       + jnp.einsum("oi,bit->bot", w[:, :, 1], x1))
    conv1 = lambda w, b, z: jnp.einsum("oi,bit->bot", w[:, :, 0], z) + b[None, :, None]
    f = conv2(p["wf"]) + conv1(p["wcf"], p["bcf"], ctx)
    g = conv2(p["wg"]) + conv1(p["wcg"], p["bcg"], ctx)
    gated = jnp.tanh(f) * jax.nn.sigmoid(g)
    residual = conv1(p["wr"], p["br"], gated) + x1
    skip = conv1(p["ws"], p["bs"], gated)[:, :, -skip_size:]
    return residual, skip


if __name__ == "__main__":
    key = jax.random.PRNGKey(0)
    B, C, S, T = 2, 8, 8, 16          # batch, residual_channels, skip_channels, time
    dilation = 2
    skip_size = 10
    T_out = T - dilation

    keys = jax.random.split(key, 12)
    scale = 0.2
    params = {
        "wf":  scale * jax.random.normal(keys[0], (C, C, 2), jnp.float32),
        "wg":  scale * jax.random.normal(keys[1], (C, C, 2), jnp.float32),
        "wcf": scale * jax.random.normal(keys[2], (C, C, 1), jnp.float32),
        "bcf": scale * jax.random.normal(keys[3], (C,), jnp.float32),
        "wcg": scale * jax.random.normal(keys[4], (C, C, 1), jnp.float32),
        "bcg": scale * jax.random.normal(keys[5], (C,), jnp.float32),
        "wr":  scale * jax.random.normal(keys[6], (C, C, 1), jnp.float32),
        "br":  scale * jax.random.normal(keys[7], (C,), jnp.float32),
        "ws":  scale * jax.random.normal(keys[8], (S, C, 1), jnp.float32),
        "bs":  scale * jax.random.normal(keys[9], (S,), jnp.float32),
    }

    x = jax.random.normal(keys[10], (B, C, T), jnp.float32)          # AudioTensor (NCW)
    ctx = jax.random.normal(keys[11], (B, C, T_out), jnp.float32)    # VideoTensor (NCW)

    res_ref, skip_ref = _reference(x, ctx, params, dilation, skip_size)

    # f32 compute path: checks the kernel structure (tolerance allows MXU
    # matmul rounding vs the XLA einsum reference).
    res32, skip32 = gated_residual_conv1d(
        x, ctx, params, dilation=dilation, skip_size=skip_size,
        compute_dtype=jnp.float32)
    jax.block_until_ready((res32, skip32))
    assert res32.shape == (B, C, T_out) and skip32.shape == (B, S, skip_size)
    assert jnp.allclose(res32, res_ref, atol=5e-3, rtol=5e-3)
    assert jnp.allclose(skip32.astype(jnp.float32), skip_ref, atol=5e-3, rtol=5e-3)

    # bf16 compute path (default, performance): looser tolerance.
    res_bf, skip_bf = gated_residual_conv1d(
        x, ctx, params, dilation=dilation, skip_size=skip_size)
    jax.block_until_ready((res_bf, skip_bf))
    assert res_bf.shape == (B, C, T_out) and skip_bf.shape == (B, S, skip_size)
    assert jnp.allclose(res_bf, res_ref, atol=5e-2, rtol=5e-2)
    assert jnp.allclose(skip_bf.astype(jnp.float32), skip_ref, atol=5e-2, rtol=5e-2)

    print("KERNEL_OK")
</pallas_src>

<mosaic_0001>
module attributes {stable_mosaic.version = 11 : i64} {
  func.func @_gated_residual_kernel(%arg0: i32, %arg1: i32, %arg2: memref<1x16x8xf32, #tpu.memory_space<vmem>>, %arg3: memref<1x14x8xf32, #tpu.memory_space<vmem>>, %arg4: memref<8x16xf32, #tpu.memory_space<vmem>>, %arg5: memref<8x16xf32, #tpu.memory_space<vmem>>, %arg6: memref<8x16xf32, #tpu.memory_space<vmem>>, %arg7: memref<1x16xf32, #tpu.memory_space<vmem>>, %arg8: memref<8x8xf32, #tpu.memory_space<vmem>>, %arg9: memref<1x8xf32, #tpu.memory_space<vmem>>, %arg10: memref<8x8xf32, #tpu.memory_space<vmem>>, %arg11: memref<1x8xf32, #tpu.memory_space<vmem>>, %arg12: memref<1x14x8xf32, #tpu.memory_space<vmem>>, %arg13: memref<1x10x8xf32, #tpu.memory_space<vmem>>) attributes {dimension_semantics = [#tpu.dimension_semantics<parallel>, #tpu.dimension_semantics<parallel>], iteration_bounds = array<i64: 2, 1>, scalar_prefetch = 0 : i64, scratch_operands = 0 : i64, tpu.core_type = #tpu.core_type<tc>, window_params = [{transform_indices = @transform_0, window_bounds = array<i64: 1, 16, 8>}, {transform_indices = @transform_1, window_bounds = array<i64: 1, 14, 8>}, {pipeline_mode = #tpu.pipeline_mode<synchronous>, transform_indices = @transform_2, window_bounds = array<i64: 8, 16>}, {pipeline_mode = #tpu.pipeline_mode<synchronous>, transform_indices = @transform_3, window_bounds = array<i64: 8, 16>}, {pipeline_mode = #tpu.pipeline_mode<synchronous>, transform_indices = @transform_4, window_bounds = array<i64: 8, 16>}, {pipeline_mode = #tpu.pipeline_mode<synchronous>, transform_indices = @transform_5, window_bounds = array<i64: 1, 16>}, {pipeline_mode = #tpu.pipeline_mode<synchronous>, transform_indices = @transform_6, window_bounds = array<i64: 8, 8>}, {pipeline_mode = #tpu.pipeline_mode<synchronous>, transform_indices = @transform_7, window_bounds = array<i64: 1, 8>}, {pipeline_mode = #tpu.pipeline_mode<synchronous>, transform_indices = @transform_8, window_bounds = array<i64: 8, 8>}, {pipeline_mode = #tpu.pipeline_mode<synchronous>, transform_indices = @transform_9, window_bounds = array<i64: 1, 8>}, {transform_indices = @transform_10, window_bounds = array<i64: 1, 14, 8>}, {transform_indices = @transform_11, window_bounds = array<i64: 1, 10, 8>}]} {
    %c0 = arith.constant 0 : index
    %c0_0 = arith.constant 0 : index
    %c0_1 = arith.constant 0 : index
    %0 = vector.load %arg2[%c0, %c0_0, %c0_1] : memref<1x16x8xf32, #tpu.memory_space<vmem>>, vector<1x14x8xf32>
    %1 = vector.shape_cast %0 : vector<1x14x8xf32> to vector<14x8xf32>
    %c0_2 = arith.constant 0 : index
    %c2 = arith.constant 2 : index
    %c0_3 = arith.constant 0 : index
    %2 = vector.load %arg2[%c0_2, %c2, %c0_3] : memref<1x16x8xf32, #tpu.memory_space<vmem>>, vector<1x14x8xf32>
    %3 = vector.shape_cast %2 : vector<1x14x8xf32> to vector<14x8xf32>
    %c0_4 = arith.constant 0 : index
    %c0_5 = arith.constant 0 : index
    %c0_6 = arith.constant 0 : index
    %4 = vector.load %arg3[%c0_4, %c0_5, %c0_6] : memref<1x14x8xf32, #tpu.memory_space<vmem>>, vector<1x14x8xf32>
    %5 = vector.shape_cast %4 : vector<1x14x8xf32> to vector<14x8xf32>
    %c0_7 = arith.constant 0 : index
    %c0_8 = arith.constant 0 : index
    %6 = vector.load %arg4[%c0_7, %c0_8] : memref<8x16xf32, #tpu.memory_space<vmem>>, vector<8x16xf32>
    %cst = arith.constant dense<0.000000e+00> : vector<14x16xf32>
    %7 = tpu.matmul %1, %6, %cst {dimension_numbers = #tpu.dot_dimension_numbers<[1], [0], [0], [1], [0, 0, 1, 1], [], []>} : vector<14x8xf32>, vector<8x16xf32>, vector<14x16xf32> -> vector<14x16xf32>
    %c0_9 = arith.constant 0 : index
    %c0_10 = arith.constant 0 : index
    %8 = vector.load %arg5[%c0_9, %c0_10] : memref<8x16xf32, #tpu.memory_space<vmem>>, vector<8x16xf32>
    %cst_11 = arith.constant dense<0.000000e+00> : vector<14x16xf32>
    %9 = tpu.matmul %3, %8, %cst_11 {dimension_numbers = #tpu.dot_dimension_numbers<[1], [0], [0], [1], [0, 0, 1, 1], [], []>} : vector<14x8xf32>, vector<8x16xf32>, vector<14x16xf32> -> vector<14x16xf32>
    %10 = arith.addf %7, %9 : vector<14x16xf32>
    %c0_12 = arith.constant 0 : index
    %c0_13 = arith.constant 0 : index
    %11 = vector.load %arg6[%c0_12, %c0_13] : memref<8x16xf32, #tpu.memory_space<vmem>>, vector<8x16xf32>
    %cst_14 = arith.constant dense<0.000000e+00> : vector<14x16xf32>
    %12 = tpu.matmul %5, %11, %cst_14 {dimension_numbers = #tpu.dot_dimension_numbers<[1], [0], [0], [1], [0, 0, 1, 1], [], []>} : vector<14x8xf32>, vector<8x16xf32>, vector<14x16xf32> -> vector<14x16xf32>
    %13 = arith.addf %10, %12 : vector<14x16xf32>
    %c0_15 = arith.constant 0 : index
    %c0_16 = arith.constant 0 : index
    %14 = vector.load %arg7[%c0_15, %c0_16] : memref<1x16xf32, #tpu.memory_space<vmem>>, vector<1x16xf32>
    %15 = vector.broadcast %14 : vector<1x16xf32> to vector<14x16xf32>
    %16 = arith.addf %13, %15 : vector<14x16xf32>
    %17 = vector.extract_strided_slice %16 {offsets = [0, 0], sizes = [14, 8], strides = [1, 1]} : vector<14x16xf32> to vector<14x8xf32>
    %18 = math.tanh %17 : vector<14x8xf32>
    %19 = vector.extract_strided_slice %16 {offsets = [0, 8], sizes = [14, 8], strides = [1, 1]} : vector<14x16xf32> to vector<14x8xf32>
    %20 = arith.negf %19 : vector<14x8xf32>
    %21 = math.exp %20 : vector<14x8xf32>
    %cst_17 = arith.constant 1.000000e+00 : f32
    %22 = vector.broadcast %cst_17 : f32 to vector<14x8xf32>
    %23 = arith.addf %22, %21 : vector<14x8xf32>
    %24 = arith.divf %22, %23 : vector<14x8xf32>
    %25 = arith.mulf %18, %24 : vector<14x8xf32>
    %c0_18 = arith.constant 0 : index
    %c0_19 = arith.constant 0 : index
    %26 = vector.load %arg8[%c0_18, %c0_19] : memref<8x8xf32, #tpu.memory_space<vmem>>, vector<8x8xf32>
    %cst_20 = arith.constant dense<0.000000e+00> : vector<14x8xf32>
    %27 = tpu.matmul %25, %26, %cst_20 {dimension_numbers = #tpu.dot_dimension_numbers<[1], [0], [0], [1], [0, 0, 1, 1], [], []>} : vector<14x8xf32>, vector<8x8xf32>, vector<14x8xf32> -> vector<14x8xf32>
    %c0_21 = arith.constant 0 : index
    %c0_22 = arith.constant 0 : index
    %28 = vector.load %arg9[%c0_21, %c0_22] : memref<1x8xf32, #tpu.memory_space<vmem>>, vector<1x8xf32>
    %29 = vector.broadcast %28 : vector<1x8xf32> to vector<14x8xf32>
    %30 = arith.addf %27, %29 : vector<14x8xf32>
    %31 = arith.addf %30, %3 : vector<14x8xf32>
    %c0_23 = arith.constant 0 : index
    %c0_24 = arith.constant 0 : index
    %c0_25 = arith.constant 0 : index
    %32 = vector.load %arg12[%c0_23, %c0_24, %c0_25] : memref<1x14x8xf32, #tpu.memory_space<vmem>>, vector<1x14x8xf32>
    %33 = vector.shape_cast %32 : vector<1x14x8xf32> to vector<14x8xf32>
    %34 = vector.shape_cast %31 : vector<14x8xf32> to vector<1x14x8xf32>
    tpu.vector_store %arg12[%c0_23, %c0_24, %c0_25], %34 {strides = array<i32>} : memref<1x14x8xf32, #tpu.memory_space<vmem>>, vector<1x14x8xf32>,
    %35 = vector.extract_strided_slice %25 {offsets = [4, 0], sizes = [10, 8], strides = [1, 1]} : vector<14x8xf32> to vector<10x8xf32>
    %c0_26 = arith.constant 0 : index
    %c0_27 = arith.constant 0 : index
    %36 = vector.load %arg10[%c0_26, %c0_27] : memref<8x8xf32, #tpu.memory_space<vmem>>, vector<8x8xf32>
    %cst_28 = arith.constant dense<0.000000e+00> : vector<10x8xf32>
    %37 = tpu.matmul %35, %36, %cst_28 {dimension_numbers = #tpu.dot_dimension_numbers<[1], [0], [0], [1], [0, 0, 1, 1], [], []>} : vector<10x8xf32>, vector<8x8xf32>, vector<10x8xf32> -> vector<10x8xf32>
    %c0_29 = arith.constant 0 : index
    %c0_30 = arith.constant 0 : index
    %38 = vector.load %arg11[%c0_29, %c0_30] : memref<1x8xf32, #tpu.memory_space<vmem>>, vector<1x8xf32>
    %39 = vector.broadcast %38 : vector<1x8xf32> to vector<10x8xf32>
    %40 = arith.addf %37, %39 : vector<10x8xf32>
    %c0_31 = arith.constant 0 : index
    %c0_32 = arith.constant 0 : index
    %c0_33 = arith.constant 0 : index
    %41 = vector.load %arg13[%c0_31, %c0_32, %c0_33] : memref<1x10x8xf32, #tpu.memory_space<vmem>>, vector<1x10x8xf32>
    %42 = vector.shape_cast %41 : vector<1x10x8xf32> to vector<10x8xf32>
    %43 = vector.shape_cast %40 : vector<10x8xf32> to vector<1x10x8xf32>
    tpu.vector_store %arg13[%c0_31, %c0_32, %c0_33], %43 {strides = array<i32>} : memref<1x10x8xf32, #tpu.memory_space<vmem>>, vector<1x10x8xf32>,
    return
  }
  func.func @transform_0(%arg0: i32, %arg1: i32) -> (i32, i32, i32) {
    %c0_i32 = arith.constant 0 : i32
    %c0_i32_0 = arith.constant 0 : i32
    %c0_i32_1 = arith.constant 0 : i32
    return %arg0, %c0_i32, %c0_i32_0 : i32, i32, i32
  }
  func.func @transform_1(%arg0: i32, %arg1: i32) -> (i32, i32, i32) {
    %c0_i32 = arith.constant 0 : i32
    %c0_i32_0 = arith.constant 0 : i32
    return %arg0, %arg1, %c0_i32 : i32, i32, i32
  }
  func.func @transform_2(%arg0: i32, %arg1: i32) -> (i32, i32) {
    %c0_i32 = arith.constant 0 : i32
    %c0_i32_0 = arith.constant 0 : i32
    %c0_i32_1 = arith.constant 0 : i32
    return %c0_i32, %c0_i32_0 : i32, i32
  }
  func.func @transform_3(%arg0: i32, %arg1: i32) -> (i32, i32) {
    %c0_i32 = arith.constant 0 : i32
    %c0_i32_0 = arith.constant 0 : i32
    %c0_i32_1 = arith.constant 0 : i32
    return %c0_i32, %c0_i32_0 : i32, i32
  }
  func.func @transform_4(%arg0: i32, %arg1: i32) -> (i32, i32) {
    %c0_i32 = arith.constant 0 : i32
    %c0_i32_0 = arith.constant 0 : i32
    %c0_i32_1 = arith.constant 0 : i32
    return %c0_i32, %c0_i32_0 : i32, i32
  }
  func.func @transform_5(%arg0: i32, %arg1: i32) -> (i32, i32) {
    %c0_i32 = arith.constant 0 : i32
    %c0_i32_0 = arith.constant 0 : i32
    %c0_i32_1 = arith.constant 0 : i32
    return %c0_i32, %c0_i32_0 : i32, i32
  }
  func.func @transform_6(%arg0: i32, %arg1: i32) -> (i32, i32) {
    %c0_i32 = arith.constant 0 : i32
    %c0_i32_0 = arith.constant 0 : i32
    %c0_i32_1 = arith.constant 0 : i32
    return %c0_i32, %c0_i32_0 : i32, i32
  }
  func.func @transform_7(%arg0: i32, %arg1: i32) -> (i32, i32) {
    %c0_i32 = arith.constant 0 : i32
    %c0_i32_0 = arith.constant 0 : i32
    %c0_i32_1 = arith.constant 0 : i32
    return %c0_i32, %c0_i32_0 : i32, i32
  }
  func.func @transform_8(%arg0: i32, %arg1: i32) -> (i32, i32) {
    %c0_i32 = arith.constant 0 : i32
    %c0_i32_0 = arith.constant 0 : i32
    %c0_i32_1 = arith.constant 0 : i32
    return %c0_i32, %c0_i32_0 : i32, i32
  }
  func.func @transform_9(%arg0: i32, %arg1: i32) -> (i32, i32) {
    %c0_i32 = arith.constant 0 : i32
    %c0_i32_0 = arith.constant 0 : i32
    %c0_i32_1 = arith.constant 0 : i32
    return %c0_i32, %c0_i32_0 : i32, i32
  }
  func.func @transform_10(%arg0: i32, %arg1: i32) -> (i32, i32, i32) {
    %c0_i32 = arith.constant 0 : i32
    %c0_i32_0 = arith.constant 0 : i32
    return %arg0, %arg1, %c0_i32 : i32, i32, i32
  }
  func.func @transform_11(%arg0: i32, %arg1: i32) -> (i32, i32, i32) {
    %c0_i32 = arith.constant 0 : i32
    %c0_i32_0 = arith.constant 0 : i32
    %c0_i32_1 = arith.constant 0 : i32
    return %arg0, %c0_i32, %c0_i32_0 : i32, i32, i32
  }
}

</mosaic_0001>

<llo_original>
// kernel: tpu_custom_call.1
$region0: #{tpu_custom_call.1}
  #allocation0 [shape = 'u32[]', space=smem, size = 0x4, offset = 0x4, fixed_abs, tag = 'smem constant byte address 0x4 - core index']
  #allocation1 [shape = 'u32[144,128]{1,0:T(1,128)}', space=vmem, size = 0x12000, scoped, tag = 'internal scratch']
  %s0 = inlined_call_operand.vmem [shape: f32[2,16,8], index: 0, kind: input, shape index: {}]
  %s1 = inlined_call_operand.vmem [shape: f32[2,14,8], index: 1, kind: input, shape index: {}]
  %s2 = inlined_call_operand.vmem [shape: f32[8,16], index: 2, kind: input, shape index: {}]
  %s3 = inlined_call_operand.vmem [shape: f32[8,16], index: 3, kind: input, shape index: {}]
  %s4 = inlined_call_operand.vmem [shape: f32[8,16], index: 4, kind: input, shape index: {}]
  %s5 = inlined_call_operand.vmem [shape: f32[1,16], index: 5, kind: input, shape index: {}]
  %s6 = inlined_call_operand.vmem [shape: f32[8,8], index: 6, kind: input, shape index: {}]
  %s7 = inlined_call_operand.vmem [shape: f32[1,8], index: 7, kind: input, shape index: {}]
  %s8 = inlined_call_operand.vmem [shape: f32[8,8], index: 8, kind: input, shape index: {}]
  %s9 = inlined_call_operand.vmem [shape: f32[1,8], index: 9, kind: input, shape index: {}]
  %s10 = inlined_call_operand.vmem [shape: f32[2,14,8], index: 10, kind: output, shape index: {0}]
  %s11 = inlined_call_operand.vmem [shape: f32[2,10,8], index: 11, kind: output, shape index: {1}]
  %12 = xla_tuple %s10, %s11
  %s13 = sld [smem:[#allocation0]]
  $region81: #{tpu_custom_call.1} parent=0
    _
  %s15 = ssub.s32 1, %s13
  %s16 = scalar_select 0, %s15, %s13
  loop: start=0, step=1, limit=4
  $region2: #{tpu_custom_call.1} parent=0 // loop_pre_header
    _
  $region3: #{tpu_custom_call.1} parent=0 // loop_header
    %s18 = sphi 0, %s22
    %p19 = scmp.ge.s32.totalorder %s18, 4
    %s25 = sphi 0, %s37
    %s26 = sphi 0, %s33
    %s27 = sphi 0, %s25
    %s28 = sphi 0, %s26
    %s29 = sphi 0, %s27
    %s30 = sphi 0, %s28
    %s40 = sphi 0, %s42
    %s43 = sphi 0, %s40
    %s44 = sphi 0, %s43
    %s60 = sphi 0, %s44
    %s68 = sphi 0, %s70
    %s71 = sphi 0, %s68
    %s72 = sphi 0, %s71
    %s88 = sphi 0, %s72
    %s92 = sphi 0, %s92
    %s94 = sphi 0, %s92
    %s95 = sphi 0, %s94
    %s109 = sphi 0, %s95
    %s113 = sphi 0, %s113
    %s115 = sphi 0, %s113
    %s116 = sphi 0, %s115
    %s130 = sphi 0, %s116
    %s134 = sphi 0, %s134
    %s136 = sphi 0, %s134
    %s137 = sphi 0, %s136
    %s151 = sphi 0, %s137
    %s155 = sphi 0, %s155
    %s157 = sphi 0, %s155
    %s158 = sphi 0, %s157
    %s172 = sphi 0, %s158
    %s176 = sphi 0, %s176
    %s178 = sphi 0, %s176
    %s179 = sphi 0, %s178
    %s193 = sphi 0, %s179
    %s197 = sphi 0, %s197
    %s199 = sphi 0, %s197
    %s200 = sphi 0, %s199
    %s214 = sphi 0, %s200
    %s218 = sphi 0, %s218
    %s220 = sphi 0, %s218
    %s221 = sphi 0, %s220
    %s235 = sphi 0, %s221
    %s239 = sphi 0, %s239
    %s241 = sphi 0, %s239
    %s242 = sphi 0, %s241
    %s256 = sphi 0, %s242
    %s264 = sphi 0, %s266
    %s267 = sphi 0, %s264
    %s268 = sphi 0, %s267
    %s284 = sphi 0, %s268
    %s290 = sphi 0, %s292
    %s293 = sphi 0, %s290
    %s294 = sphi 0, %s293
    %s310 = sphi 0, %s294
  $region4: #{tpu_custom_call.1} parent=0 // loop_header_branch
    %21 = sbr.rel (%p19) target = $region8
  $region5: #{tpu_custom_call.1} parent=0 // loop_body
    %s23 = ssub.s32 %s18, 1
    %s24 = ssub.s32 %s18, 2
    %s31 = sadd.s32 1, %s26
    %p32 = scmp.ge.s32.totalorder %s31, 1
    %s33 = scalar_select %p32, 0, %s31
    %s34 = sadd.s32 1, %s25
    %s35 = scalar_select %p32, %s34, %s25
    %p36 = scmp.ge.s32.totalorder %s35, 2
    %s37 = scalar_select %p36, 0, %s35
    %s38 = ssub.s32 %s25, %s37
    %p39 = scmp.eq.s32.totalorder %s38, 0
    %s41 = sadd.s32 %s40, 1
    %s42 = scalar_select %p39, %s40, %s41
    %p45 = pneg %p39
    %p46 = scmp.eq.s32.totalorder %s18, 1
    %p47 = por %p45, %p46
    %p48 = scmp.ne.s32.totalorder %s40, %s43
    %p49 = scmp.eq.s32.totalorder %s18, 0
    %p50 = por %p48, %p49
    %p51 = scmp.ne.s32.totalorder %s40, %s43
    %p52 = scmp.eq.s32.totalorder %s23, 1
    %p53 = por %p51, %p52
    %p54 = scmp.ne.s32.totalorder %s43, %s44
    %p55 = scmp.eq.s32.totalorder %s23, 0
    %p56 = por %p54, %p55
    %p57 = scmp.ne.s32.totalorder %s43, %s44
    %p58 = scmp.eq.s32.totalorder %s24, 1
    %p59 = por %p57, %p58
    %p61 = scmp.ne.s32.totalorder %s44, %s60
    %p62 = scmp.eq.s32.totalorder %s24, 0
    %p63 = por %p61, %p62
    %s64 = ssub.s32 %s25, %s37
    %s65 = ssub.s32 %s26, %s33
    %s66 = sor.u32 %s64, %s65
    %p67 = scmp.eq.s32.totalorder %s66, 0
    %s69 = sadd.s32 %s68, 1
    %s70 = scalar_select %p67, %s68, %s69
    %p73 = pneg %p67
    %p74 = scmp.eq.s32.totalorder %s18, 1
    %p75 = por %p73, %p74
    %p76 = scmp.ne.s32.totalorder %s68, %s71
    %p77 = scmp.eq.s32.totalorder %s18, 0
    %p78 = por %p76, %p77
    %p79 = scmp.ne.s32.totalorder %s68, %s71
    %p80 = scmp.eq.s32.totalorder %s23, 1
    %p81 = por %p79, %p80
    %p82 = scmp.ne.s32.totalorder %s71, %s72
    %p83 = scmp.eq.s32.totalorder %s23, 0
    %p84 = por %p82, %p83
    %p85 = scmp.ne.s32.totalorder %s71, %s72
    %p86 = scmp.eq.s32.totalorder %s24, 1
    %p87 = por %p85, %p86
    %p89 = scmp.ne.s32.totalorder %s72, %s88
    %p90 = scmp.eq.s32.totalorder %s24, 0
    %p91 = por %p89, %p90
    %s93 = sadd.s32 %s92, 1
    %p96 = scmp.eq.s32.totalorder %s18, 1
    %p97 = scmp.ne.s32.totalorder %s92, %s94
    %p98 = scmp.eq.s32.totalorder %s18, 0
    %p99 = por %p97, %p98
    %p100 = scmp.ne.s32.totalorder %s92, %s94
    %p101 = scmp.eq.s32.totalorder %s23, 1
    %p102 = por %p100, %p101
    %p103 = scmp.ne.s32.totalorder %s94, %s95
    %p104 = scmp.eq.s32.totalorder %s23, 0
    %p105 = por %p103, %p104
    %p106 = scmp.ne.s32.totalorder %s94, %s95
    %p107 = scmp.eq.s32.totalorder %s24, 1
    %p108 = por %p106, %p107
    %p110 = scmp.ne.s32.totalorder %s95, %s109
    %p111 = scmp.eq.s32.totalorder %s24, 0
    %p112 = por %p110, %p111
    %s114 = sadd.s32 %s113, 1
    %p117 = scmp.eq.s32.totalorder %s18, 1
    %p118 = scmp.ne.s32.totalorder %s113, %s115
    %p119 = scmp.eq.s32.totalorder %s18, 0
    %p120 = por %p118, %p119
    %p121 = scmp.ne.s32.totalorder %s113, %s115
    %p122 = scmp.eq.s32.totalorder %s23, 1
    %p123 = por %p121, %p122
    %p124 = scmp.ne.s32.totalorder %s115, %s116
    %p125 = scmp.eq.s32.totalorder %s23, 0
    %p126 = por %p124, %p125
    %p127 = scmp.ne.s32.totalorder %s115, %s116
    %p128 = scmp.eq.s32.totalorder %s24, 1
    %p129 = por %p127, %p128
    %p131 = scmp.ne.s32.totalorder %s116, %s130
    %p132 = scmp.eq.s32.totalorder %s24, 0
    %p133 = por %p131, %p132
    %s135 = sadd.s32 %s134, 1
    %p138 = scmp.eq.s32.totalorder %s18, 1
    %p139 = scmp.ne.s32.totalorder %s134, %s136
    %p140 = scmp.eq.s32.totalorder %s18, 0
    %p141 = por %p139, %p140
    %p142 = scmp.ne.s32.totalorder %s134, %s136
    %p143 = scmp.eq.s32.totalorder %s23, 1
    %p144 = por %p142, %p143
    %p145 = scmp.ne.s32.totalorder %s136, %s137
    %p146 = scmp.eq.s32.totalorder %s23, 0
    %p147 = por %p145, %p146
    %p148 = scmp.ne.s32.totalorder %s136, %s137
    %p149 = scmp.eq.s32.totalorder %s24, 1
    %p150 = por %p148, %p149
    %p152 = scmp.ne.s32.totalorder %s137, %s151
    %p153 = scmp.eq.s32.totalorder %s24, 0
    %p154 = por %p152, %p153
    %s156 = sadd.s32 %s155, 1
    %p159 = scmp.eq.s32.totalorder %s18, 1
    %p160 = scmp.ne.s32.totalorder %s155, %s157
    %p161 = scmp.eq.s32.totalorder %s18, 0
    %p162 = por %p160, %p161
    %p163 = scmp.ne.s32.totalorder %s155, %s157
    %p164 = scmp.eq.s32.totalorder %s23, 1
    %p165 = por %p163, %p164
    %p166 = scmp.ne.s32.totalorder %s157, %s158
    %p167 = scmp.eq.s32.totalorder %s23, 0
    %p168 = por %p166, %p167
    %p169 = scmp.ne.s32.totalorder %s157, %s158
    %p170 = scmp.eq.s32.totalorder %s24, 1
    %p171 = por %p169, %p170
    %p173 = scmp.ne.s32.totalorder %s158, %s172
    %p174 = scmp.eq.s32.totalorder %s24, 0
    %p175 = por %p173, %p174
    %s177 = sadd.s32 %s176, 1
    %p180 = scmp.eq.s32.totalorder %s18, 1
    %p181 = scmp.ne.s32.totalorder %s176, %s178
    %p182 = scmp.eq.s32.totalorder %s18, 0
    %p183 = por %p181, %p182
    %p184 = scmp.ne.s32.totalorder %s176, %s178
    %p185 = scmp.eq.s32.totalorder %s23, 1
    %p186 = por %p184, %p185
    %p187 = scmp.ne.s32.totalorder %s178, %s179
    %p188 = scmp.eq.s32.totalorder %s23, 0
    %p189 = por %p187, %p188
    %p190 = scmp.ne.s32.totalorder %s178, %s179
    %p191 = scmp.eq.s32.totalorder %s24, 1
    %p192 = por %p190, %p191
    %p194 = scmp.ne.s32.totalorder %s179, %s193
    %p195 = scmp.eq.s32.totalorder %s24, 0
    %p196 = por %p194, %p195
    %s198 = sadd.s32 %s197, 1
    %p201 = scmp.eq.s32.totalorder %s18, 1
    %p202 = scmp.ne.s32.totalorder %s197, %s199
    %p203 = scmp.eq.s32.totalorder %s18, 0
    %p204 = por %p202, %p203
    %p205 = scmp.ne.s32.totalorder %s197, %s199
    %p206 = scmp.eq.s32.totalorder %s23, 1
    %p207 = por %p205, %p206
    %p208 = scmp.ne.s32.totalorder %s199, %s200
    %p209 = scmp.eq.s32.totalorder %s23, 0
    %p210 = por %p208, %p209
    %p211 = scmp.ne.s32.totalorder %s199, %s200
    %p212 = scmp.eq.s32.totalorder %s24, 1
    %p213 = por %p211, %p212
    %p215 = scmp.ne.s32.totalorder %s200, %s214
    %p216 = scmp.eq.s32.totalorder %s24, 0
    %p217 = por %p215, %p216
    %s219 = sadd.s32 %s218, 1
    %p222 = scmp.eq.s32.totalorder %s18, 1
    %p223 = scmp.ne.s32.totalorder %s218, %s220
    %p224 = scmp.eq.s32.totalorder %s18, 0
    %p225 = por %p223, %p224
    %p226 = scmp.ne.s32.totalorder %s218, %s220
    %p227 = scmp.eq.s32.totalorder %s23, 1
    %p228 = por %p226, %p227
    %p229 = scmp.ne.s32.totalorder %s220, %s221
    %p230 = scmp.eq.s32.totalorder %s23, 0
    %p231 = por %p229, %p230
    %p232 = scmp.ne.s32.totalorder %s220, %s221
    %p233 = scmp.eq.s32.totalorder %s24, 1
    %p234 = por %p232, %p233
    %p236 = scmp.ne.s32.totalorder %s221, %s235
    %p237 = scmp.eq.s32.totalorder %s24, 0
    %p238 = por %p236, %p237
    %s240 = sadd.s32 %s239, 1
    %p243 = scmp.eq.s32.totalorder %s18, 1
    %p244 = scmp.ne.s32.totalorder %s239, %s241
    %p245 = scmp.eq.s32.totalorder %s18, 0
    %p246 = por %p244, %p245
    %p247 = scmp.ne.s32.totalorder %s239, %s241
    %p248 = scmp.eq.s32.totalorder %s23, 1
    %p249 = por %p247, %p248
    %p250 = scmp.ne.s32.totalorder %s241, %s242
    %p251 = scmp.eq.s32.totalorder %s23, 0
    %p252 = por %p250, %p251
    %p253 = scmp.ne.s32.totalorder %s241, %s242
    %p254 = scmp.eq.s32.totalorder %s24, 1
    %p255 = por %p253, %p254
    %p257 = scmp.ne.s32.totalorder %s242, %s256
    %p258 = scmp.eq.s32.totalorder %s24, 0
    %p259 = por %p257, %p258
    %s260 = ssub.s32 %s25, %s37
    %s261 = ssub.s32 %s26, %s33
    %s262 = sor.u32 %s260, %s261
    %p263 = scmp.eq.s32.totalorder %s262, 0
    %s265 = sadd.s32 %s264, 1
    %s266 = scalar_select %p263, %s264, %s265
    %p269 = pneg %p263
    %p270 = scmp.eq.s32.totalorder %s18, 1
    %p271 = por %p269, %p270
    %p272 = scmp.ne.s32.totalorder %s264, %s267
    %p273 = scmp.eq.s32.totalorder %s18, 0
    %p274 = por %p272, %p273
    %p275 = scmp.ne.s32.totalorder %s264, %s267
    %p276 = scmp.eq.s32.totalorder %s23, 1
    %p277 = por %p275, %p276
    %p278 = scmp.ne.s32.totalorder %s267, %s268
    %p279 = scmp.eq.s32.totalorder %s23, 0
    %p280 = por %p278, %p279
    %p281 = scmp.ne.s32.totalorder %s267, %s268
    %p282 = scmp.eq.s32.totalorder %s24, 1
    %p283 = por %p281, %p282
    %p285 = scmp.ne.s32.totalorder %s268, %s284
    %p286 = scmp.eq.s32.totalorder %s24, 0
    %p287 = por %p285, %p286
    %s288 = ssub.s32 %s25, %s37
    %p289 = scmp.eq.s32.totalorder %s288, 0
    %s291 = sadd.s32 %s290, 1
    %s292 = scalar_select %p289, %s290, %s291
    %p295 = pneg %p289
    %p296 = scmp.eq.s32.totalorder %s18, 1
    %p297 = por %p295, %p296
    %p298 = scmp.ne.s32.totalorder %s290, %s293
    %p299 = scmp.eq.s32.totalorder %s18, 0
    %p300 = por %p298, %p299
    %p301 = scmp.ne.s32.totalorder %s290, %s293
    %p302 = scmp.eq.s32.totalorder %s23, 1
    %p303 = por %p301, %p302
    %p304 = scmp.ne.s32.totalorder %s293, %s294
    %p305 = scmp.eq.s32.totalorder %s23, 0
    %p306 = por %p304, %p305
    %p307 = scmp.ne.s32.totalorder %s293, %s294
    %p308 = scmp.eq.s32.totalorder %s24, 1
    %p309 = por %p307, %p308
    %p311 = scmp.ne.s32.totalorder %s294, %s310
    %p312 = scmp.eq.s32.totalorder %s24, 0
    %p313 = por %p311, %p312
    %p314 = scmp.le.s32.totalorder 1, %s18
    %p315 = scmp.lt.s32.totalorder %s18, 3
    %p316 = pnand %p314, %p315
    %p317 = pneg %p316
    // Predicated region
    $region9: #{tpu_custom_call.1} parent=5 // pred_check
      _
    $region10: #{tpu_custom_call.1} parent=5 // pred_check_branch
      %319 = sbr.rel (%p316) target = $region12
    $region11: #{tpu_custom_call.1} parent=5 // pred_region
      %s320 = ssub.s32 %s18, 1
      // Predicated region
      $region13: #{tpu_custom_call.1} parent=11 // pred_check
        %p321 = pneg %p105
      $region14: #{tpu_custom_call.1} parent=11 // pred_check_branch
        %323 = sbr.rel (%p321) target = $region16
      $region15: #{tpu_custom_call.1} parent=11 // pred_region
        _
      $region16: #{tpu_custom_call.1} parent=11 // pred_fallthru
        _
      // Predicated region
      $region17: #{tpu_custom_call.1} parent=11 // pred_check
        %p324 = pneg %p126
      $region18: #{tpu_custom_call.1} parent=11 // pred_check_branch
        %326 = sbr.rel (%p324) target = $region20
      $region19: #{tpu_custom_call.1} parent=11 // pred_region
        _
      $region20: #{tpu_custom_call.1} parent=11 // pred_fallthru
        _
      // Predicated region
      $region21: #{tpu_custom_call.1} parent=11 // pred_check
        %p327 = pneg %p147
      $region22: #{tpu_custom_call.1} parent=11 // pred_check_branch
        %329 = sbr.rel (%p327) target = $region24
      $region23: #{tpu_custom_call.1} parent=11 // pred_region
        _
      $region24: #{tpu_custom_call.1} parent=11 // pred_fallthru
        _
      // Predicated region
      $region25: #{tpu_custom_call.1} parent=11 // pred_check
        %p330 = pneg %p168
      $region26: #{tpu_custom_call.1} parent=11 // pred_check_branch
        %332 = sbr.rel (%p330) target = $region28
      $region27: #{tpu_custom_call.1} parent=11 // pred_region
        _
      $region28: #{tpu_custom_call.1} parent=11 // pred_fallthru
        _
      // Predicated region
      $region29: #{tpu_custom_call.1} parent=11 // pred_check
        %p333 = pneg %p189
      $region30: #{tpu_custom_call.1} parent=11 // pred_check_branch
        %335 = sbr.rel (%p333) target = $region32
      $region31: #{tpu_custom_call.1} parent=11 // pred_region
        _
      $region32: #{tpu_custom_call.1} parent=11 // pred_fallthru
        _
      // Predicated region
      $region33: #{tpu_custom_call.1} parent=11 // pred_check
        %p336 = pneg %p210
      $region34: #{tpu_custom_call.1} parent=11 // pred_check_branch
        %338 = sbr.rel (%p336) target = $region36
      $region35: #{tpu_custom_call.1} parent=11 // pred_region
        _
      $region36: #{tpu_custom_call.1} parent=11 // pred_fallthru
        _
      // Predicated region
      $region37: #{tpu_custom_call.1} parent=11 // pred_check
        %p339 = pneg %p231
      $region38: #{tpu_custom_call.1} parent=11 // pred_check_branch
        %341 = sbr.rel (%p339) target = $region40
      $region39: #{tpu_custom_call.1} parent=11 // pred_region
        _
      $region40: #{tpu_custom_call.1} parent=11 // pred_fallthru
        _
      // Predicated region
      $region41: #{tpu_custom_call.1} parent=11 // pred_check
        %p342 = pneg %p252
      $region42: #{tpu_custom_call.1} parent=11 // pred_check_branch
        %344 = sbr.rel (%p342) target = $region44
      $region43: #{tpu_custom_call.1} parent=11 // pred_region
        _
      $region44: #{tpu_custom_call.1} parent=11 // pred_fallthru
        _
    $region12: #{tpu_custom_call.1} parent=5 // pred_fallthru
      _
    %p345 = scmp.lt.s32.totalorder %s18, 2
    // Predicated region
    $region45: #{tpu_custom_call.1} parent=5 // pred_check
      %p346 = pneg %p345
    $region46: #{tpu_custom_call.1} parent=5 // pred_check_branch
      %348 = sbr.rel (%p346) target = $region48
    $region47: #{tpu_custom_call.1} parent=5 // pred_region
      // Predicated region
      $region49: #{tpu_custom_call.1} parent=47 // pred_check
        %p349 = pneg %p50
      $region50: #{tpu_custom_call.1} parent=47 // pred_check_branch
        %351 = sbr.rel (%p349) target = $region52
      $region51: #{tpu_custom_call.1} parent=47 // pred_region
        %p352 = scmp.lt.s32.totalorder %s25, 1
        %s353 = scalar_select %p352, %s25, 1
        %s354 = smul.addr %s353, 2
        %s355 = smul.addr %s354, 8
        %s356 = scalar_lea.vmem %s0, %s355
      $region52: #{tpu_custom_call.1} parent=47 // pred_fallthru
        _
      // Predicated region
      $region53: #{tpu_custom_call.1} parent=47 // pred_check
        %p357 = pneg %p78
      $region54: #{tpu_custom_call.1} parent=47 // pred_check_branch
        %359 = sbr.rel (%p357) target = $region56
      $region55: #{tpu_custom_call.1} parent=47 // pred_region
        %s360 = smul.u32 2, %s26
        %p361 = scmp.lt.s32.totalorder %s25, 1
        %s362 = scalar_select %p361, %s25, 1
        %p363 = scmp.lt.s32.totalorder %s360, 1
        %s364 = scalar_select %p363, %s360, 1
        %s365 = smul.addr %s362, 2
        %s366 = sadd.s32 %s364, %s365
        %s367 = smul.addr %s366, 8
        %s368 = scalar_lea.vmem %s1, %s367
        %s369 = smul.u32 2, %s26
      $region56: #{tpu_custom_call.1} parent=47 // pred_fallthru
        _
    $region48: #{tpu_custom_call.1} parent=5 // pred_fallthru
      _
    %p370 = scmp.le.s32.totalorder 1, %s18
    %p371 = scmp.lt.s32.totalorder %s18, 3
    %p372 = pnand %p370, %p371
    %p373 = pneg %p372
    // Predicated region
    $region57: #{tpu_custom_call.1} parent=5 // pred_check
      _
    $region58: #{tpu_custom_call.1} parent=5 // pred_check_branch
      %375 = sbr.rel (%p372) target = $region60
    $region59: #{tpu_custom_call.1} parent=5 // pred_region
      %s376 = ssub.s32 %s18, 1
      %p377 = scmp.lt.s32.totalorder %s27, 1
      %s378 = scalar_select %p377, %s27, 1
      %s379 = smul.addr %s378, 2
      %s380 = smul.addr %s379, 8
      %s381 = scalar_lea.vmem %s0, %s380
      %p382 = pneg %p56
      %p383 = pneg %p53
      %s384 = smul.u32 2, %s28
      %p385 = scmp.lt.s32.totalorder %s27, 1
      %s386 = scalar_select %p385, %s27, 1
      %p387 = scmp.lt.s32.totalorder %s384, 1
      %s388 = scalar_select %p387, %s384, 1
      %s389 = smul.addr %s386, 2
      %s390 = sadd.s32 %s388, %s389
      %s391 = smul.addr %s390, 8
      %s392 = scalar_lea.vmem %s1, %s391
      %p393 = pneg %p84
      %p394 = pneg %p81
      %p395 = pneg %p105
      %p396 = pneg %p102
      %p397 = pneg %p126
      %p398 = pneg %p123
      %p399 = pneg %p147
      %p400 = pneg %p144
      %p401 = pneg %p168
      %p402 = pneg %p165
      %p403 = pneg %p189
      %p404 = pneg %p186
      %p405 = pneg %p210
      %p406 = pneg %p207
      %p407 = pneg %p231
      %p408 = pneg %p228
      %p409 = pneg %p252
      %p410 = pneg %p249
      %p411 = pneg %p280
      %p412 = pneg %p277
      %s413 = smul.u32 2, %s28
      %p414 = scmp.lt.s32.totalorder %s27, 1
      %s415 = scalar_select %p414, %s27, 1
      %p416 = scmp.lt.s32.totalorder %s413, 1
      %s417 = scalar_select %p416, %s413, 1
      %s418 = smul.addr %s415, 2
      %s419 = sadd.s32 %s417, %s418
      %s420 = smul.addr %s419, 8
      %s421 = scalar_lea.vmem %s10, %s420
      %p422 = pneg %p306
      %p423 = pneg %p303
      %p424 = scmp.lt.s32.totalorder %s27, 1
      %s425 = scalar_select %p424, %s27, 1
      %s426 = smul.addr %s425, 2
      %s427 = smul.addr %s426, 8
      %s428 = scalar_lea.vmem %s11, %s427
      %p429 = scmp.lt.s32.totalorder %s27, 1
      %s430 = scalar_select %p429, %s27, 1
      %s431 = smul.addr %s430, 2
      %s432 = smul.addr %s431, 8
      %s433 = scalar_lea.vmem %s0, %s432
      %s434 = smul.u32 2, %s28
      %p435 = scmp.lt.s32.totalorder %s27, 1
      %s436 = scalar_select %p435, %s27, 1
      %p437 = scmp.lt.s32.totalorder %s434, 1
      %s438 = scalar_select %p437, %s434, 1
      %s439 = smul.addr %s436, 2
      %s440 = sadd.s32 %s438, %s439
      %s441 = smul.addr %s440, 8
      %s442 = scalar_lea.vmem %s1, %s441
      %s443 = smul.u32 2, %s28
      %s444 = smul.u32 2, %s28
      %p445 = scmp.lt.s32.totalorder %s27, 1
      %s446 = scalar_select %p445, %s27, 1
      %p447 = scmp.lt.s32.totalorder %s444, 1
      %s448 = scalar_select %p447, %s444, 1
      %s449 = smul.addr %s446, 2
      %s450 = sadd.s32 %s448, %s449
      %s451 = smul.addr %s450, 8
      %s452 = scalar_lea.vmem %s10, %s451
      %s453 = smul.u32 2, %s28
      %p454 = scmp.lt.s32.totalorder %s27, 1
      %s455 = scalar_select %p454, %s27, 1
      %s456 = smul.addr %s455, 2
      %s457 = smul.addr %s456, 8
      %s458 = scalar_lea.vmem %s11, %s457
      %v459 = vld [vmem:[%s433] sm:$0xff]
      %v460 = vld [vmem:[%s433 + $0x8] sm:$0x3f]
      %v461 = vld [vmem:[%s433 + $0x2] sm:$0xff]
      %v462 = vld [vmem:[%s433 + $0xa] sm:$0x3f]
      %v463 = vld [vmem:[%s442] sm:$0xff]
      %v464 = vld [vmem:[%s442 + $0x8] sm:$0x3f]
      %v465 = vld [vmem:[%s2] sm:$0xff]
      %v466 = vld [vmem:[%s3] sm:$0xff]
      %vm467 = vcmask 64512
      %v469 = vsel %vm467, %v461, 0
      %v472 = vsel %vm467, %v462, 0
      %474 = vmatprep.subr.mxu0 0.0
      %475 = vmatpush1.msra.mxu0 %v466
      %476 = vmatprep.subr.mxu0 0.0
      %477 = vmatpush1.msra.mxu0 0.0
      %478 = vmatprep.subr.mxu0 0.0
      %479 = vmatpush1.msra.mxu0 0.0
      %480 = vmatprep.subr.mxu0 0.0
      %481 = vmatpush1.msra.mxu0 0.0
      %482 = vmatprep.subr.mxu0 0.0
      %483 = vmatpush1.msra.mxu0 0.0
      %484 = vmatprep.subr.mxu0 0.0
      %485 = vmatpush1.msra.mxu0 0.0
      %486 = vmatprep.subr.mxu0 0.0
      %487 = vmatpush1.msra.mxu0 0.0
      %488 = vmatprep.subr.mxu0 0.0
      %489 = vmatpush1.msra.mxu0 0.0
      %490 = vmatprep.subr.mxu0 0.0
      %491 = vmatpush1.msra.mxu0 0.0
      %492 = vmatprep.subr.mxu0 0.0
      %493 = vmatpush1.msra.mxu0 0.0
      %494 = vmatprep.subr.mxu0 0.0
      %495 = vmatpush1.msra.mxu0 0.0
      %496 = vmatprep.subr.mxu0 0.0
      %497 = vmatpush1.msra.mxu0 0.0
      %498 = vmatprep.subr.mxu0 0.0
      %499 = vmatpush1.msra.mxu0 0.0
      %500 = vmatprep.subr.mxu0 0.0
      %501 = vmatpush1.msra.mxu0 0.0
      %502 = vmatprep.subr.mxu0 0.0
      %503 = vmatpush1.msra.mxu0 0.0
      %504 = vmatprep.subr.mxu0 0.0
      %505 = vmatpush1.msra.mxu0 0.0
      %506 = vmatprep.subr.mxu0 0.0
      %507 = vmatpush1.msra.mxu0 0.0
      %508 = vmatprep.subr.mxu0 0.0
      %509 = vmatpush1.msra.mxu0 0.0
      %510 = vmatprep.subr.mxu0 0.0
      %511 = vmatpush1.msra.mxu0 0.0
      %512 = vmatprep.subr.mxu0 0.0
      %513 = vmatpush1.msra.mxu0 0.0
      %514 = vmatprep.subr.mxu0 0.0
      %515 = vmatpush1.msra.mxu0 0.0
      %516 = vmatprep.subr.mxu0 0.0
      %517 = vmatpush1.msra.mxu0 0.0
      %518 = vmatprep.subr.mxu0 0.0
      %519 = vmatpush1.msra.mxu0 0.0
      %520 = vmatprep.subr.mxu0 0.0
      %521 = vmatpush1.msra.mxu0 0.0
      %522 = vmatprep.subr.mxu0 0.0
      %523 = vmatpush1.msra.mxu0 0.0
      %524 = vmatprep.subr.mxu0 0.0
      %525 = vmatpush1.msra.mxu0 0.0
      %526 = vmatprep.subr.mxu0 0.0
      %527 = vmatpush1.msra.mxu0 0.0
      %528 = vmatprep.subr.mxu0 0.0
      %529 = vmatpush1.msra.mxu0 0.0
      %530 = vmatprep.subr.mxu0 0.0
      %531 = vmatpush1.msra.mxu0 0.0
      %532 = vmatprep.subr.mxu0 0.0
      %533 = vmatpush1.msra.mxu0 0.0
      %534 = vmatprep.subr.mxu0 0.0
      %535 = vmatpush1.msra.mxu0 0.0
      %536 = vmatprep.subr.mxu0 0.0
      %537 = vmatpush1.msra.mxu0 0.0
      %538 = vmatprep.mubr.f32.mxu0 0.0
      %539 = vmatmul.mubr.f32.gmra.mrb[0].mxu0 %v469
      %v540 = vpop.f32.mrb[0].mxu0
      %v541 = vadd.f32 0.0, %v540
      %v542 = vpop.f32.mrb[0].mxu0
      %543 = vmatprep.mubr.f32.mxu0 0.0
      %544 = vmatmul.mubr.f32.gmra.mrb[0].mxu0 %v472
      %v545 = vpop.f32.mrb[0].mxu0
      %v546 = vadd.f32 0.0, %v545
      %v547 = vpop.f32.mrb[0].mxu0
      %548 = vdwg.mxu0
      %v550 = vsel %vm467, %v459, 0
      %v553 = vsel %vm467, %v460, 0
      %555 = vmatprep.subr.mxu0 0.0
      %556 = vmatpush1.msra.mxu0 %v465
      %557 = vmatprep.subr.mxu0 0.0
      %558 = vmatpush1.msra.mxu0 0.0
      %559 = vmatprep.subr.mxu0 0.0
      %560 = vmatpush1.msra.mxu0 0.0
      %561 = vmatprep.subr.mxu0 0.0
      %562 = vmatpush1.msra.mxu0 0.0
      %563 = vmatprep.subr.mxu0 0.0
      %564 = vmatpush1.msra.mxu0 0.0
      %565 = vmatprep.subr.mxu0 0.0
      %566 = vmatpush1.msra.mxu0 0.0
      %567 = vmatprep.subr.mxu0 0.0
      %568 = vmatpush1.msra.mxu0 0.0
      %569 = vmatprep.subr.mxu0 0.0
      %570 = vmatpush1.msra.mxu0 0.0
      %571 = vmatprep.subr.mxu0 0.0
      %572 = vmatpush1.msra.mxu0 0.0
      %573 = vmatprep.subr.mxu0 0.0
      %574 = vmatpush1.msra.mxu0 0.0
      %575 = vmatprep.subr.mxu0 0.0
      %576 = vmatpush1.msra.mxu0 0.0
      %577 = vmatprep.subr.mxu0 0.0
      %578 = vmatpush1.msra.mxu0 0.0
      %579 = vmatprep.subr.mxu0 0.0
      %580 = vmatpush1.msra.mxu0 0.0
      %581 = vmatprep.subr.mxu0 0.0
      %582 = vmatpush1.msra.mxu0 0.0
      %583 = vmatprep.subr.mxu0 0.0
      %584 = vmatpush1.msra.mxu0 0.0
      %585 = vmatprep.subr.mxu0 0.0
      %586 = vmatpush1.msra.mxu0 0.0
      %587 = vmatprep.subr.mxu0 0.0
      %588 = vmatpush1.msra.mxu0 0.0
      %589 = vmatprep.subr.mxu0 0.0
      %590 = vmatpush1.msra.mxu0 0.0
      %591 = vmatprep.subr.mxu0 0.0
      %592 = vmatpush1.msra.mxu0 0.0
      %593 = vmatprep.subr.mxu0 0.0
      %594 = vmatpush1.msra.mxu0 0.0
      %595 = vmatprep.subr.mxu0 0.0
      %596 = vmatpush1.msra.mxu0 0.0
      %597 = vmatprep.subr.mxu0 0.0
      %598 = vmatpush1.msra.mxu0 0.0
      %599 = vmatprep.subr.mxu0 0.0
      %600 = vmatpush1.msra.mxu0 0.0
      %601 = vmatprep.subr.mxu0 0.0
      %602 = vmatpush1.msra.mxu0 0.0
      %603 = vmatprep.subr.mxu0 0.0
      %604 = vmatpush1.msra.mxu0 0.0
      %605 = vmatprep.subr.mxu0 0.0
      %606 = vmatpush1.msra.mxu0 0.0
      %607 = vmatprep.subr.mxu0 0.0
      %608 = vmatpush1.msra.mxu0 0.0
      %609 = vmatprep.subr.mxu0 0.0
      %610 = vmatpush1.msra.mxu0 0.0
      %611 = vmatprep.subr.mxu0 0.0
      %612 = vmatpush1.msra.mxu0 0.0
      %613 = vmatprep.subr.mxu0 0.0
      %614 = vmatpush1.msra.mxu0 0.0
      %615 = vmatprep.subr.mxu0 0.0
      %616 = vmatpush1.msra.mxu0 0.0
      %617 = vmatprep.subr.mxu0 0.0
      %618 = vmatpush1.msra.mxu0 0.0
      %619 = vmatprep.mubr.f32.mxu0 0.0
      %620 = vmatmul.mubr.f32.gmra.mrb[0].mxu0 %v550
      %v621 = vpop.f32.mrb[0].mxu0
      %v622 = vadd.f32 %v541, %v621
      %v623 = vpop.f32.mrb[0].mxu0
      %624 = vmatprep.mubr.f32.mxu0 0.0
      %625 = vmatmul.mubr.f32.gmra.mrb[0].mxu0 %v553
      %v626 = vpop.f32.mrb[0].mxu0
      %v627 = vadd.f32 %v546, %v626
      %v628 = vpop.f32.mrb[0].mxu0
      %629 = vdwg.mxu0
      %v630 = vld [vmem:[%s4] sm:$0xff]
      %v632 = vsel %vm467, %v463, 0
      %v635 = vsel %vm467, %v464, 0
      %637 = vmatprep.subr.mxu0 0.0
      %638 = vmatpush1.msra.mxu0 %v630
      %639 = vmatprep.subr.mxu0 0.0
      %640 = vmatpush1.msra.mxu0 0.0
      %641 = vmatprep.subr.mxu0 0.0
      %642 = vmatpush1.msra.mxu0 0.0
      %643 = vmatprep.subr.mxu0 0.0
      %644 = vmatpush1.msra.mxu0 0.0
      %645 = vmatprep.subr.mxu0 0.0
      %646 = vmatpush1.msra.mxu0 0.0
      %647 = vmatprep.subr.mxu0 0.0
      %648 = vmatpush1.msra.mxu0 0.0
      %649 = vmatprep.subr.mxu0 0.0
      %650 = vmatpush1.msra.mxu0 0.0
      %651 = vmatprep.subr.mxu0 0.0
      %652 = vmatpush1.msra.mxu0 0.0
      %653 = vmatprep.subr.mxu0 0.0
      %654 = vmatpush1.msra.mxu0 0.0
      %655 = vmatprep.subr.mxu0 0.0
      %656 = vmatpush1.msra.mxu0 0.0
      %657 = vmatprep.subr.mxu0 0.0
      %658 = vmatpush1.msra.mxu0 0.0
      %659 = vmatprep.subr.mxu0 0.0
      %660 = vmatpush1.msra.mxu0 0.0
      %661 = vmatprep.subr.mxu0 0.0
      %662 = vmatpush1.msra.mxu0 0.0
      %663 = vmatprep.subr.mxu0 0.0
      %664 = vmatpush1.msra.mxu0 0.0
      %665 = vmatprep.subr.mxu0 0.0
      %666 = vmatpush1.msra.mxu0 0.0
      %667 = vmatprep.subr.mxu0 0.0
      %668 = vmatpush1.msra.mxu0 0.0
      %669 = vmatprep.subr.mxu0 0.0
      %670 = vmatpush1.msra.mxu0 0.0
      %671 = vmatprep.subr.mxu0 0.0
      %672 = vmatpush1.msra.mxu0 0.0
      %673 = vmatprep.subr.mxu0 0.0
      %674 = vmatpush1.msra.mxu0 0.0
      %675 = vmatprep.subr.mxu0 0.0
      %676 = vmatpush1.msra.mxu0 0.0
      %677 = vmatprep.subr.mxu0 0.0
      %678 = vmatpush1.msra.mxu0 0.0
      %679 = vmatprep.subr.mxu0 0.0
      %680 = vmatpush1.msra.mxu0 0.0
      %681 = vmatprep.subr.mxu0 0.0
      %682 = vmatpush1.msra.mxu0 0.0
      %683 = vmatprep.subr.mxu0 0.0
      %684 = vmatpush1.msra.mxu0 0.0
      %685 = vmatprep.subr.mxu0 0.0
      %686 = vmatpush1.msra.mxu0 0.0
      %687 = vmatprep.subr.mxu0 0.0
      %688 = vmatpush1.msra.mxu0 0.0
      %689 = vmatprep.subr.mxu0 0.0
      %690 = vmatpush1.msra.mxu0 0.0
      %691 = vmatprep.subr.mxu0 0.0
      %692 = vmatpush1.msra.mxu0 0.0
      %693 = vmatprep.subr.mxu0 0.0
      %694 = vmatpush1.msra.mxu0 0.0
      %695 = vmatprep.subr.mxu0 0.0
      %696 = vmatpush1.msra.mxu0 0.0
      %697 = vmatprep.subr.mxu0 0.0
      %698 = vmatpush1.msra.mxu0 0.0
      %699 = vmatprep.subr.mxu0 0.0
      %700 = vmatpush1.msra.mxu0 0.0
      %701 = vmatprep.mubr.f32.mxu0 0.0
      %702 = vmatmul.mubr.f32.gmra.mrb[0].mxu0 %v632
      %v703 = vpop.f32.mrb[0].mxu0
      %v704 = vadd.f32 0.0, %v703
      %v705 = vpop.f32.mrb[0].mxu0
      %706 = vmatprep.mubr.f32.mxu0 0.0
      %707 = vmatmul.mubr.f32.gmra.mrb[0].mxu0 %v635
      %v708 = vpop.f32.mrb[0].mxu0
      %v709 = vadd.f32 0.0, %v708
      %v710 = vpop.f32.mrb[0].mxu0
      %711 = vdwg.mxu0
      %v712 = vadd.f32 %v622, %v704
      %v713 = vadd.f32 %v627, %v709
      %v714 = vld [vmem:[%s5] sm:$0x1]
      %v716 = vlaneseq
      %v717 = vshrl.u32 %v716, 7
      %v718 = vsub.s32 0, %v717
      %v719 = vrot.slane %v714, %v718
      %v721 = vadd.f32 %v712, %v719
      %v722 = vadd.f32 %v713, %v719
      %v723 = vtanh.pop %v721
      %v724 = vtanh.pop %v722
      %v725 = vxor.u32 %v721, 2147483648
      %v726 = vxor.u32 %v722, 2147483648
      %v727 = vmul.f32 %v725, 1.442695
      %v728 = vpow.pop %v727
      %v729 = vmul.f32 %v726, 1.442695
      %v730 = vpow.pop %v729
      %v731 = vadd.f32 %v728, 1.0
      %v732 = vadd.f32 %v730, 1.0
      %v733 = vrcp.pop %v731
      %v734 = vmul.f32 1.0, %v733
      %v735 = vrcp.pop %v732
      %v736 = vmul.f32 1.0, %v735
      %739 = vrot.lane.b32.xlu0 %v734, 120
      %v740 = vpop.permute.xlu0 %739
      %741 = vrot.lane.b32.xlu0 %v736, 120
      %v742 = vpop.permute.xlu0 %741
      %v745 = vmul.f32 %v723, %v740
      %v746 = vmul.f32 %v724, %v742
      %v747 = vld [vmem:[%s6] sm:$0xff]
      %v748 = vld [vmem:[%s7] sm:$0x1]
      %v750 = vlaneseq
      %v751 = vshrl.u32 %v750, 7
      %v752 = vsub.s32 0, %v751
      %v753 = vrot.slane %v748, %v752
      %v756 = vsel %vm467, %v745, 0
      %v759 = vsel %vm467, %v746, 0
      %761 = vmatprep.subr.mxu0 0.0
      %762 = vmatpush1.msra.mxu0 %v747
      %763 = vmatprep.subr.mxu0 0.0
      %764 = vmatpush1.msra.mxu0 0.0
      %765 = vmatprep.subr.mxu0 0.0
      %766 = vmatpush1.msra.mxu0 0.0
      %767 = vmatprep.subr.mxu0 0.0
      %768 = vmatpush1.msra.mxu0 0.0
      %769 = vmatprep.subr.mxu0 0.0
      %770 = vmatpush1.msra.mxu0 0.0
      %771 = vmatprep.subr.mxu0 0.0
      %772 = vmatpush1.msra.mxu0 0.0
      %773 = vmatprep.subr.mxu0 0.0
      %774 = vmatpush1.msra.mxu0 0.0
      %775 = vmatprep.subr.mxu0 0.0
      %776 = vmatpush1.msra.mxu0 0.0
      %777 = vmatprep.subr.mxu0 0.0
      %778 = vmatpush1.msra.mxu0 0.0
      %779 = vmatprep.subr.mxu0 0.0
      %780 = vmatpush1.msra.mxu0 0.0
      %781 = vmatprep.subr.mxu0 0.0
      %782 = vmatpush1.msra.mxu0 0.0
      %783 = vmatprep.subr.mxu0 0.0
      %784 = vmatpush1.msra.mxu0 0.0
      %785 = vmatprep.subr.mxu0 0.0
      %786 = vmatpush1.msra.mxu0 0.0
      %787 = vmatprep.subr.mxu0 0.0
      %788 = vmatpush1.msra.mxu0 0.0
      %789 = vmatprep.subr.mxu0 0.0
      %790 = vmatpush1.msra.mxu0 0.0
      %791 = vmatprep.subr.mxu0 0.0
      %792 = vmatpush1.msra.mxu0 0.0
      %793 = vmatprep.subr.mxu0 0.0
      %794 = vmatpush1.msra.mxu0 0.0
      %795 = vmatprep.subr.mxu0 0.0
      %796 = vmatpush1.msra.mxu0 0.0
      %797 = vmatprep.subr.mxu0 0.0
      %798 = vmatpush1.msra.mxu0 0.0
      %799 = vmatprep.subr.mxu0 0.0
      %800 = vmatpush1.msra.mxu0 0.0
      %801 = vmatprep.subr.mxu0 0.0
      %802 = vmatpush1.msra.mxu0 0.0
      %803 = vmatprep.subr.mxu0 0.0
      %804 = vmatpush1.msra.mxu0 0.0
      %805 = vmatprep.subr.mxu0 0.0
      %806 = vmatpush1.msra.mxu0 0.0
      %807 = vmatprep.subr.mxu0 0.0
      %808 = vmatpush1.msra.mxu0 0.0
      %809 = vmatprep.subr.mxu0 0.0
      %810 = vmatpush1.msra.mxu0 0.0
      %811 = vmatprep.subr.mxu0 0.0
      %812 = vmatpush1.msra.mxu0 0.0
      %813 = vmatprep.subr.mxu0 0.0
      %814 = vmatpush1.msra.mxu0 0.0
      %815 = vmatprep.subr.mxu0 0.0
      %816 = vmatpush1.msra.mxu0 0.0
      %817 = vmatprep.subr.mxu0 0.0
      %818 = vmatpush1.msra.mxu0 0.0
      %819 = vmatprep.subr.mxu0 0.0
      %820 = vmatpush1.msra.mxu0 0.0
      %821 = vmatprep.subr.mxu0 0.0
      %822 = vmatpush1.msra.mxu0 0.0
      %823 = vmatprep.subr.mxu0 0.0
      %824 = vmatpush1.msra.mxu0 0.0
      %825 = vmatprep.mubr.f32.mxu0 0.0
      %826 = vmatmul.mubr.f32.gmra.mrb[0].mxu0 %v756
      %v827 = vpop.f32.mrb[0].mxu0
      %v828 = vadd.f32 %v753, %v827
      %v829 = vpop.f32.mrb[0].mxu0
      %830 = vmatprep.mubr.f32.mxu0 0.0
      %831 = vmatmul.mubr.f32.gmra.mrb[0].mxu0 %v759
      %v832 = vpop.f32.mrb[0].mxu0
      %v833 = vadd.f32 %v753, %v832
      %v834 = vpop.f32.mrb[0].mxu0
      %835 = vdwg.mxu0
      %v836 = vadd.f32 %v828, %v461
      %v837 = vadd.f32 %v833, %v462
      %838 = vst.msk [vmem:[%s452] sm:$0xff] %vm467, %v836
      %vm839 = vcmask 62464
      %840 = vst.msk [vmem:[%s452 + $0x8] sm:$0x3f] %vm839, %v837
      %v841 = vld [vmem:[%s8] sm:$0xff]
      %v842 = vld [vmem:[%s9] sm:$0x1]
      %v844 = vlaneseq
      %v845 = vshrl.u32 %v844, 7
      %v846 = vsub.s32 0, %v845
      %v847 = vrot.slane %v842, %v846
      %vm849 = vcmask 1043456
      %v850 = vrot.slane %v745, 4
      %v851 = vrot.slane %v746, 4
      %v852 = vsel %vm849, %v850, %v851
      %v853 = vsel %vm467, %v852, 0
      %v855 = vsel %vm467, %v851, 0
      %857 = vmatprep.subr.mxu0 0.0
      %858 = vmatpush1.msra.mxu0 %v841
      %859 = vmatprep.subr.mxu0 0.0
      %860 = vmatpush1.msra.mxu0 0.0
      %861 = vmatprep.subr.mxu0 0.0
      %862 = vmatpush1.msra.mxu0 0.0
      %863 = vmatprep.subr.mxu0 0.0
      %864 = vmatpush1.msra.mxu0 0.0
      %865 = vmatprep.subr.mxu0 0.0
      %866 = vmatpush1.msra.mxu0 0.0
      %867 = vmatprep.subr.mxu0 0.0
      %868 = vmatpush1.msra.mxu0 0.0
      %869 = vmatprep.subr.mxu0 0.0
      %870 = vmatpush1.msra.mxu0 0.0
      %871 = vmatprep.subr.mxu0 0.0
      %872 = vmatpush1.msra.mxu0 0.0
      %873 = vmatprep.subr.mxu0 0.0
      %874 = vmatpush1.msra.mxu0 0.0
      %875 = vmatprep.subr.mxu0 0.0
      %876 = vmatpush1.msra.mxu0 0.0
      %877 = vmatprep.subr.mxu0 0.0
      %878 = vmatpush1.msra.mxu0 0.0
      %879 = vmatprep.subr.mxu0 0.0
      %880 = vmatpush1.msra.mxu0 0.0
      %881 = vmatprep.subr.mxu0 0.0
      %882 = vmatpush1.msra.mxu0 0.0
      %883 = vmatprep.subr.mxu0 0.0
      %884 = vmatpush1.msra.mxu0 0.0
      %885 = vmatprep.subr.mxu0 0.0
      %886 = vmatpush1.msra.mxu0 0.0
      %887 = vmatprep.subr.mxu0 0.0
      %888 = vmatpush1.msra.mxu0 0.0
      %889 = vmatprep.subr.mxu0 0.0
      %890 = vmatpush1.msra.mxu0 0.0
      %891 = vmatprep.subr.mxu0 0.0
      %892 = vmatpush1.msra.mxu0 0.0
      %893 = vmatprep.subr.mxu0 0.0
      %894 = vmatpush1.msra.mxu0 0.0
      %895 = vmatprep.subr.mxu0 0.0
      %896 = vmatpush1.msra.mxu0 0.0
      %897 = vmatprep.subr.mxu0 0.0
      %898 = vmatpush1.msra.mxu0 0.0
      %899 = vmatprep.subr.mxu0 0.0
      %900 = vmatpush1.msra.mxu0 0.0
      %901 = vmatprep.subr.mxu0 0.0
      %902 = vmatpush1.msra.mxu0 0.0
      %903 = vmatprep.subr.mxu0 0.0
      %904 = vmatpush1.msra.mxu0 0.0
      %905 = vmatprep.subr.mxu0 0.0
      %906 = vmatpush1.msra.mxu0 0.0
      %907 = vmatprep.subr.mxu0 0.0
      %908 = vmatpush1.msra.mxu0 0.0
      %909 = vmatprep.subr.mxu0 0.0
      %910 = vmatpush1.msra.mxu0 0.0
      %911 = vmatprep.subr.mxu0 0.0
      %912 = vmatpush1.msra.mxu0 0.0
      %913 = vmatprep.subr.mxu0 0.0
      %914 = vmatpush1.msra.mxu0 0.0
      %915 = vmatprep.subr.mxu0 0.0
      %916 = vmatpush1.msra.mxu0 0.0
      %917 = vmatprep.subr.mxu0 0.0
      %918 = vmatpush1.msra.mxu0 0.0
      %919 = vmatprep.subr.mxu0 0.0
      %920 = vmatpush1.msra.mxu0 0.0
      %921 = vmatprep.mubr.f32.mxu0 0.0
      %922 = vmatmul.mubr.f32.gmra.mrb[0].mxu0 %v853
      %v923 = vpop.f32.mrb[0].mxu0
      %v924 = vadd.f32 %v847, %v923
      %v925 = vpop.f32.mrb[0].mxu0
      %926 = vmatprep.mubr.f32.mxu0 0.0
      %927 = vmatmul.mubr.f32.gmra.mrb[0].mxu0 %v855
      %v928 = vpop.f32.mrb[0].mxu0
      %v929 = vadd.f32 %v847, %v928
      %v930 = vpop.f32.mrb[0].mxu0
      %931 = vdwg.mxu0
      %932 = vst.msk [vmem:[%s458] sm:$0xff] %vm467, %v924
      %vm933 = vcmask 58368
      %934 = vst.msk [vmem:[%s458 + $0x8] sm:$0x3] %vm933, %v929
      %s935 = smul.u32 2, %s28
      %p936 = scmp.lt.s32.totalorder %s27, 1
      %s937 = scalar_select %p936, %s27, 1
      %p938 = scmp.lt.s32.totalorder %s935, 1
      %s939 = scalar_select %p938, %s935, 1
      %s940 = smul.addr %s937, 2
      %s941 = sadd.s32 %s939, %s940
      %s942 = smul.addr %s941, 8
      %s943 = scalar_lea.vmem %s10, %s942
      %p944 = scmp.lt.s32.totalorder %s27, 1
      %s945 = scalar_select %p944, %s27, 1
      %s946 = smul.addr %s945, 2
      %s947 = smul.addr %s946, 8
      %s948 = scalar_lea.vmem %s11, %s947
      // Predicated region
      $region61: #{tpu_custom_call.1} parent=59 // pred_check
        %p949 = pneg %p277
      $region62: #{tpu_custom_call.1} parent=59 // pred_check_branch
        %951 = sbr.rel (%p949) target = $region64
      $region63: #{tpu_custom_call.1} parent=59 // pred_region
        %s952 = smul.u32 2, %s28
      $region64: #{tpu_custom_call.1} parent=59 // pred_fallthru
        _
      // Predicated region
      $region65: #{tpu_custom_call.1} parent=59 // pred_check
        %p953 = pneg %p303
      $region66: #{tpu_custom_call.1} parent=59 // pred_check_branch
        %955 = sbr.rel (%p953) target = $region68
      $region67: #{tpu_custom_call.1} parent=59 // pred_region
        _
      $region68: #{tpu_custom_call.1} parent=59 // pred_fallthru
        _
    $region60: #{tpu_custom_call.1} parent=5 // pred_fallthru
      _
    %p956 = scmp.le.s32.totalorder 2, %s18
    // Predicated region
    $region69: #{tpu_custom_call.1} parent=5 // pred_check
      %p957 = pneg %p956
    $region70: #{tpu_custom_call.1} parent=5 // pred_check_branch
      %959 = sbr.rel (%p957) target = $region72
    $region71: #{tpu_custom_call.1} parent=5 // pred_region
      %s960 = ssub.s32 %s18, 2
      // Predicated region
      $region73: #{tpu_custom_call.1} parent=71 // pred_check
        %p961 = pneg %p283
      $region74: #{tpu_custom_call.1} parent=71 // pred_check_branch
        %963 = sbr.rel (%p961) target = $region76
      $region75: #{tpu_custom_call.1} parent=71 // pred_region
        %s964 = smul.u32 2, %s30
        %p965 = scmp.lt.s32.totalorder %s29, 1
        %s966 = scalar_select %p965, %s29, 1
        %p967 = scmp.lt.s32.totalorder %s964, 1
        %s968 = scalar_select %p967, %s964, 1
        %s969 = smul.addr %s966, 2
        %s970 = sadd.s32 %s968, %s969
        %s971 = smul.addr %s970, 8
        %s972 = scalar_lea.vmem %s10, %s971
      $region76: #{tpu_custom_call.1} parent=71 // pred_fallthru
        _
      // Predicated region
      $region77: #{tpu_custom_call.1} parent=71 // pred_check
        %p973 = pneg %p309
      $region78: #{tpu_custom_call.1} parent=71 // pred_check_branch
        %975 = sbr.rel (%p973) target = $region80
      $region79: #{tpu_custom_call.1} parent=71 // pred_region
        %p976 = scmp.lt.s32.totalorder %s29, 1
        %s977 = scalar_select %p976, %s29, 1
        %s978 = smul.addr %s977, 2
        %s979 = smul.addr %s978, 8
        %s980 = scalar_lea.vmem %s11, %s979
      $region80: #{tpu_custom_call.1} parent=71 // pred_fallthru
        _
    $region72: #{tpu_custom_call.1} parent=5 // pred_fallthru
      _
  $region6: #{tpu_custom_call.1} parent=0 // loop_footer
    %s22 = sadd.s32 1, %s18
  $region7: #{tpu_custom_call.1} parent=0 // loop_footer_branch
    %17 = sbr.rel target = $region3
  $region8: #{tpu_custom_call.1} parent=0 // loop_exit
    _

</llo_original>
